<compile_context>
chip_gen: v6e
topology: v6e:2x2x1
jax: 0.10.0
libtpu: 0.0.40
codegen_flags: <defaults>
</compile_context>

<pallas_src>
import math
import functools

import jax
import jax.numpy as jnp
from jax.experimental import pallas as pl
from jax.experimental.pallas import tpu as pltpu

_LANE = 128


# ---------------------------------------------------------------------------
# Kernels
# ---------------------------------------------------------------------------

def _flash_attn_kernel(q_ref, k_ref, v_ref, o_ref, m_scr, l_scr, acc_scr, *,
                       scale, H, E, D, exp_dtype):
    """Online-softmax step for one (batch, L-tile, S-tile) grid point.

    q_ref : (1, TILE_L, H*E)      k_ref : (1, TILE_S, H*E)
    v_ref : (1, TILE_S, H*D)      o_ref : (1, TILE_L, H*D)
    m_scr, l_scr : (TILE_L, H) f32 running max / denominator per head
    acc_scr      : (TILE_L, H*D) f32 running (un-normalized) output
    """
    si = pl.program_id(2)

    @pl.when(si == 0)
    def _():
        m_scr[...] = jnp.full_like(m_scr, -jnp.inf)
        l_scr[...] = jnp.zeros_like(l_scr)
        acc_scr[...] = jnp.zeros_like(acc_scr)

    # Fold the softmax scale into q (O(TILE_L*H*E) mults, negligible vs the
    # matmuls).  NOTE: for bf16 inputs this rounds the scale to bf16 before
    # the MXU; within normal attention tolerances.
    q = q_ref[0] * jnp.asarray(scale, dtype=q_ref.dtype)    # (TILE_L, H*E)
    k = k_ref[0]                                            # (TILE_S, H*E)
    v = v_ref[0]                                            # (TILE_S, H*D)

    for h in range(H):  # static unroll; H is small
        q_h = q[:, h * E:(h + 1) * E]                       # (TILE_L, E)
        k_h = k[:, h * E:(h + 1) * E]                       # (TILE_S, E)
        v_h = v[:, h * D:(h + 1) * D]                       # (TILE_S, D)

        # scores_{l,s} = sum_e q_{l,e} k_{s,e}; native-dtype MXU, f32 accum.
        s = jax.lax.dot_general(
            q_h, k_h,
            dimension_numbers=(((1,), (1,)), ((), ())),
            preferred_element_type=jnp.float32)             # (TILE_L, TILE_S)

        m_prev = m_scr[:, h:h + 1]                          # (TILE_L, 1) f32
        m_new = jnp.maximum(m_prev, jnp.max(s, axis=-1, keepdims=True))
        alpha = jnp.exp(m_prev - m_new)                     # rescale, f32

        # The big exp: bf16 on bf16 inputs (EUP is the binding unit on
        # v6e/v7x for small head dims); f32 otherwise.
        p = jnp.exp((s - m_new).astype(exp_dtype))          # (TILE_L, TILE_S)

        l_scr[:, h:h + 1] = alpha * l_scr[:, h:h + 1] + jnp.sum(
            p.astype(jnp.float32), axis=-1, keepdims=True)

        pv = jnp.dot(p.astype(v_h.dtype), v_h,
                     preferred_element_type=jnp.float32)    # (TILE_L, D) f32
        acc_scr[:, h * D:(h + 1) * D] = (
            alpha * acc_scr[:, h * D:(h + 1) * D] + pv)

        m_scr[:, h:h + 1] = m_new

    @pl.when(si == pl.num_programs(2) - 1)
    def _():
        # Normalize per head and write straight into the lane-dense output
        # block (no per-head output list / concatenate live-range pileup).
        for h in range(H):
            inv = pl.reciprocal(l_scr[:, h:h + 1], approx=True)
            o_ref[0, :, h * D:(h + 1) * D] = (
                acc_scr[:, h * D:(h + 1) * D] * inv).astype(o_ref.dtype)


def _full_attn_kernel(q_ref, k_ref, v_ref, o_ref, a_ref, *, scale, H, E, D):
    """output_attn=True path: full-S softmax, also writes the (B,H,L,S) probs.

    q_ref: (1, TILE_L, H*E)  k_ref: (1, S, H*E)  v_ref: (1, S, H*D)
    o_ref: (1, TILE_L, H*D)  a_ref: (1, H, TILE_L, S)
    """
    q = q_ref[0] * jnp.asarray(scale, dtype=q_ref.dtype)    # (TILE_L, H*E)
    k = k_ref[0]                                            # (S, H*E)
    v = v_ref[0]                                            # (S, H*D)

    for h in range(H):
        q_h = q[:, h * E:(h + 1) * E]
        k_h = k[:, h * E:(h + 1) * E]
        v_h = v[:, h * D:(h + 1) * D]

        s = jax.lax.dot_general(
            q_h, k_h,
            dimension_numbers=(((1,), (1,)), ((), ())),
            preferred_element_type=jnp.float32)             # (TILE_L, S) f32

        m = jnp.max(s, axis=-1, keepdims=True)
        p = jnp.exp(s - m)                                   # f32 for prob parity
        inv = pl.reciprocal(jnp.sum(p, axis=-1, keepdims=True), approx=False)
        attn = p * inv                                       # (TILE_L, S) f32

        a_ref[0, h] = attn.astype(a_ref.dtype)               # lane-dense store
        o_h = jnp.dot(attn.astype(v_h.dtype), v_h,
                      preferred_element_type=jnp.float32)
        o_ref[0, :, h * D:(h + 1) * D] = o_h.astype(o_ref.dtype)


# ---------------------------------------------------------------------------
# VMEM-aware tiling helpers
# ---------------------------------------------------------------------------

def _vmem_budget():
    """(usable budget, capacity) in bytes for the current chip."""
    try:
        cap = int(pltpu.get_tpu_info().vmem_capacity_bytes)
    except Exception:
        cap = 64 << 20          # conservative default (v7x per-core VMEM)
    return cap - (8 << 20), cap


def _pad_lanes(n):
    return ((n + _LANE - 1) // _LANE) * _LANE


def _flash_need(tile_l, tile_s, H, E, D, itemsize):
    blocks = 2 * itemsize * (tile_l * H * E + tile_s * H * E
                             + tile_s * H * D + tile_l * H * D)
    scratch = 4 * (tile_l * H * D + 2 * tile_l * _pad_lanes(H))
    interm = 4 * 4 * tile_l * tile_s          # live f32 score/prob tiles + slack
    return blocks + scratch + interm + (2 << 20)


def _attn_need(tile_l, S, H, E, D, itemsize, a_itemsize):
    blocks = 2 * itemsize * (tile_l * H * E + S * H * E
                             + S * H * D + tile_l * H * D)
    blocks += 2 * a_itemsize * H * tile_l * S
    interm = 4 * 4 * tile_l * S
    return blocks + interm + (2 << 20)


def _candidates(n, cands):
    out = [t for t in cands if n % t == 0]
    return out if out else [n]


def _pick_flash_tiles(L, S, H, E, D, itemsize, budget):
    l_cands = _candidates(L, (512, 256, 128, 64, 32, 16, 8))
    s_cands = _candidates(S, (1024, 512, 256, 128, 64, 32, 16, 8))
    for tl in l_cands:                     # prefer big L tiles (K/V re-read amortization)
        for ts in s_cands:
            if _flash_need(tl, ts, H, E, D, itemsize) <= budget:
                return tl, ts
    return l_cands[-1], s_cands[-1]


def _pick_attn_tile(L, S, H, E, D, itemsize, a_itemsize, budget):
    cands = _candidates(L, (512, 256, 128, 64, 32, 16, 8))
    for tl in cands:
        if _attn_need(tl, S, H, E, D, itemsize, a_itemsize) <= budget:
            return tl
    return cands[-1]


# ---------------------------------------------------------------------------
# Public wrapper (mirrors FullAttention.forward, dropout p=0)
# ---------------------------------------------------------------------------

def full_attention(queries, keys, values, scale=None, output_attn=False,
                   tile_l=None, tile_s=None):
    """queries: (B,L,H,E), keys: (B,S,H,E), values: (B,S,H,D).

    Returns (V, A) with V (B,L,H,D) and A (B,H,L,S) when output_attn=True,
    else (V, None) — mirroring the PyTorch module.
    """
    B, L, H, E = queries.shape
    _, S, _, D = values.shape
    scale = scale if scale is not None else 1.0 / math.sqrt(E)

    # Free contiguous reshapes: fold heads into the lane dimension so every
    # DMA'd block is lane-dense (no wrapper transposes).
    q2 = queries.reshape(B, L, H * E)
    k2 = keys.reshape(B, S, H * E)
    v2 = values.reshape(B, S, H * D)

    itemsize = jnp.dtype(queries.dtype).itemsize
    # bf16 exp on bf16 inputs (v6e/v7x have a bf16 EUP; Mosaic falls back to
    # f32 internally on v5e).  f32 inputs keep f32 exp for reference parity.
    exp_dtype = jnp.bfloat16 if queries.dtype == jnp.bfloat16 else jnp.float32
    budget, cap = _vmem_budget()

    o_shape = jax.ShapeDtypeStruct((B, L, H * D), queries.dtype)

    if not output_attn:
        # ---------------- fast path: flash-style S tiling ----------------
        auto_tl, auto_ts = _pick_flash_tiles(L, S, H, E, D, itemsize, budget)
        tl = tile_l or auto_tl
        ts = tile_s or auto_ts
        assert L % tl == 0 and S % ts == 0, "tile_l/tile_s must divide L/S"
        need = _flash_need(tl, ts, H, E, D, itemsize)
        grid = (B, L // tl, S // ts)

        kernel = functools.partial(_flash_attn_kernel, scale=scale,
                                   H=H, E=E, D=D, exp_dtype=exp_dtype)
        in_specs = [
            pl.BlockSpec((1, tl, H * E), lambda b, li, si: (b, li, 0)),
            pl.BlockSpec((1, ts, H * E), lambda b, li, si: (b, si, 0)),
            pl.BlockSpec((1, ts, H * D), lambda b, li, si: (b, si, 0)),
        ]
        out_shape = o_shape
        out_specs = pl.BlockSpec((1, tl, H * D), lambda b, li, si: (b, li, 0))
        scratch = [pltpu.VMEM((tl, H), jnp.float32),      # running max per head
                   pltpu.VMEM((tl, H), jnp.float32),      # running denom per head
                   pltpu.VMEM((tl, H * D), jnp.float32)]  # un-normalized output
        semantics = ("parallel", "parallel", "arbitrary")
    else:
        # ---------- output_attn path: full S resident per batch ----------
        a_dtype = queries.dtype   # mirrors torch: softmax keeps the input dtype
        a_itemsize = jnp.dtype(a_dtype).itemsize
        auto_tl = _pick_attn_tile(L, S, H, E, D, itemsize, a_itemsize, budget)
        tl = tile_l or auto_tl
        assert L % tl == 0, "tile_l must divide L"
        need = _attn_need(tl, S, H, E, D, itemsize, a_itemsize)
        grid = (B, L // tl)

        kernel = functools.partial(_full_attn_kernel, scale=scale,
                                   H=H, E=E, D=D)
        in_specs = [
            pl.BlockSpec((1, tl, H * E), lambda b, li: (b, li, 0)),
            # K/V index maps do not depend on li -> they stay resident per batch.
            pl.BlockSpec((1, S, H * E), lambda b, li: (b, 0, 0)),
            pl.BlockSpec((1, S, H * D), lambda b, li: (b, 0, 0)),
        ]
        out_shape = (o_shape, jax.ShapeDtypeStruct((B, H, L, S), a_dtype))
        out_specs = [
            pl.BlockSpec((1, tl, H * D), lambda b, li: (b, li, 0)),
            pl.BlockSpec((1, H, tl, S), lambda b, li: (b, 0, li, 0)),
        ]
        scratch = []
        semantics = ("parallel", "parallel")

    compiler_kwargs = dict(dimension_semantics=semantics)
    if need > (16 << 20):   # raise the scoped-VMEM limit only when needed
        compiler_kwargs["vmem_limit_bytes"] = int(
            min(need + (need >> 2) + (2 << 20), cap - (2 << 20)))

    out = pl.pallas_call(
        kernel,
        out_shape=out_shape,
        grid_spec=pltpu.PrefetchScalarGridSpec(
            num_scalar_prefetch=0,
            grid=grid,
            in_specs=in_specs,
            out_specs=out_specs,
            scratch_shapes=scratch),
        compiler_params=pltpu.CompilerParams(**compiler_kwargs),
    )(q2, k2, v2)

    if output_attn:
        o2, attn = out
        return o2.reshape(B, L, H, D), attn
    return out.reshape(B, L, H, D), None


# ---------------------------------------------------------------------------
# Pure-JAX reference and self-test
# ---------------------------------------------------------------------------

def _reference(queries, keys, values, scale=None):
    B, L, H, E = queries.shape
    scale = scale if scale is not None else 1.0 / math.sqrt(E)
    scores = jnp.einsum('blhe,bshe->bhls', queries, keys)
    A = jax.nn.softmax(scale * scores, axis=-1)
    V = jnp.einsum('bhls,bshd->blhd', A, values)
    return V, A


if __name__ == "__main__":
    key = jax.random.PRNGKey(0)

    # Small shapes consistent with the module: B=2, L=S=8, H=4, E=D=32.
    B, L, S, H, E, D = 2, 8, 8, 4, 32, 32
    kq, kk, kv = jax.random.split(key, 3)
    queries = jax.random.normal(kq, (B, L, H, E), dtype=jnp.float32)
    keys = jax.random.normal(kk, (B, S, H, E), dtype=jnp.float32)
    values = jax.random.normal(kv, (B, S, H, D), dtype=jnp.float32)

    V_ref, A_ref = _reference(queries, keys, values)

    # Path 1: attention probabilities requested (full-S kernel).
    V, A = full_attention(queries, keys, values, output_attn=True)
    V = jax.block_until_ready(V)
    A = jax.block_until_ready(A)
    assert V.shape == (B, L, H, D) and A.shape == (B, H, L, S)
    assert jnp.allclose(V, V_ref, atol=1e-5, rtol=1e-5)
    assert jnp.allclose(A, A_ref, atol=1e-5, rtol=1e-5)

    # Path 2 (default fast path): flash-style, no attention matrix written.
    # Tolerance is looser only because of the approximate EUP reciprocal used
    # for the final normalization.
    V2, none_attn = full_attention(queries, keys, values)
    V2 = jax.block_until_ready(V2)
    assert none_attn is None
    assert jnp.allclose(V2, V_ref, atol=5e-3, rtol=5e-3)

    # Path 3: force multiple L and S tiles (still tiny) to exercise the
    # online-softmax accumulation and rescaling across S steps.
    B2, L2, S2 = 2, 16, 32
    kq2, kk2, kv2 = jax.random.split(jax.random.PRNGKey(1), 3)
    q3 = jax.random.normal(kq2, (B2, L2, H, E), dtype=jnp.float32)
    k3 = jax.random.normal(kk2, (B2, S2, H, E), dtype=jnp.float32)
    v3 = jax.random.normal(kv2, (B2, S2, H, D), dtype=jnp.float32)
    V3_ref, _ = _reference(q3, k3, v3)
    V3, _ = full_attention(q3, k3, v3, tile_l=8, tile_s=8)
    V3 = jax.block_until_ready(V3)
    assert jnp.allclose(V3, V3_ref, atol=5e-3, rtol=5e-3)

    print("KERNEL_OK")
</pallas_src>

<mosaic_0001>
module attributes {stable_mosaic.version = 11 : i64} {
  func.func @_full_attn_kernel(%arg0: i32, %arg1: i32, %arg2: memref<1x8x128xf32, #tpu.memory_space<vmem>>, %arg3: memref<1x8x128xf32, #tpu.memory_space<vmem>>, %arg4: memref<1x8x128xf32, #tpu.memory_space<vmem>>, %arg5: memref<1x8x128xf32, #tpu.memory_space<vmem>>, %arg6: memref<1x4x8x8xf32, #tpu.memory_space<vmem>>) attributes {dimension_semantics = [#tpu.dimension_semantics<parallel>, #tpu.dimension_semantics<parallel>], iteration_bounds = array<i64: 2, 1>, scalar_prefetch = 0 : i64, scratch_operands = 0 : i64, tpu.core_type = #tpu.core_type<tc>, window_params = [{transform_indices = @transform_0, window_bounds = array<i64: 1, 8, 128>}, {transform_indices = @transform_1, window_bounds = array<i64: 1, 8, 128>}, {transform_indices = @transform_2, window_bounds = array<i64: 1, 8, 128>}, {transform_indices = @transform_3, window_bounds = array<i64: 1, 8, 128>}, {transform_indices = @transform_4, window_bounds = array<i64: 1, 4, 8, 8>}]} {
    %c0 = arith.constant 0 : index
    %c0_0 = arith.constant 0 : index
    %c0_1 = arith.constant 0 : index
    %0 = vector.load %arg2[%c0, %c0_0, %c0_1] : memref<1x8x128xf32, #tpu.memory_space<vmem>>, vector<1x8x128xf32>
    %1 = vector.shape_cast %0 : vector<1x8x128xf32> to vector<8x128xf32>
    %cst = arith.constant 0.176776692 : f32
    %2 = vector.broadcast %cst : f32 to vector<8x128xf32>
    %3 = arith.mulf %1, %2 : vector<8x128xf32>
    %c0_2 = arith.constant 0 : index
    %c0_3 = arith.constant 0 : index
    %c0_4 = arith.constant 0 : index
    %4 = vector.load %arg3[%c0_2, %c0_3, %c0_4] : memref<1x8x128xf32, #tpu.memory_space<vmem>>, vector<1x8x128xf32>
    %5 = vector.shape_cast %4 : vector<1x8x128xf32> to vector<8x128xf32>
    %c0_5 = arith.constant 0 : index
    %c0_6 = arith.constant 0 : index
    %c0_7 = arith.constant 0 : index
    %6 = vector.load %arg4[%c0_5, %c0_6, %c0_7] : memref<1x8x128xf32, #tpu.memory_space<vmem>>, vector<1x8x128xf32>
    %7 = vector.shape_cast %6 : vector<1x8x128xf32> to vector<8x128xf32>
    %8 = vector.extract_strided_slice %3 {offsets = [0, 0], sizes = [8, 32], strides = [1, 1]} : vector<8x128xf32> to vector<8x32xf32>
    %9 = vector.extract_strided_slice %5 {offsets = [0, 0], sizes = [8, 32], strides = [1, 1]} : vector<8x128xf32> to vector<8x32xf32>
    %10 = vector.extract_strided_slice %7 {offsets = [0, 0], sizes = [8, 32], strides = [1, 1]} : vector<8x128xf32> to vector<8x32xf32>
    %cst_8 = arith.constant dense<0.000000e+00> : vector<8x8xf32>
    %11 = tpu.matmul %8, %9, %cst_8 {dimension_numbers = #tpu.dot_dimension_numbers<[1], [1], [0], [0], [0, 0, 1, 0], [], []>} : vector<8x32xf32>, vector<8x32xf32>, vector<8x8xf32> -> vector<8x8xf32>
    %cst_9 = arith.constant dense<0xFF800000> : vector<8xf32>
    %12 = vector.multi_reduction <maximumf>, %11, %cst_9 [1] : vector<8x8xf32> to vector<8xf32>
    %13 = vector.shape_cast %12 : vector<8xf32> to vector<8x1xf32>
    %14 = vector.broadcast %13 : vector<8x1xf32> to vector<8x8xf32>
    %15 = arith.subf %11, %14 : vector<8x8xf32>
    %16 = math.exp %15 : vector<8x8xf32>
    %cst_10 = arith.constant dense<0.000000e+00> : vector<8xf32>
    %17 = vector.multi_reduction <add>, %16, %cst_10 [1] : vector<8x8xf32> to vector<8xf32>
    %18 = vector.shape_cast %17 : vector<8xf32> to vector<8x1xf32>
    %19 = tpu.reciprocal %18 : vector<8x1xf32> -> vector<8x1xf32>
    %20 = vector.broadcast %19 : vector<8x1xf32> to vector<8x8xf32>
    %21 = arith.mulf %16, %20 : vector<8x8xf32>
    %c0_11 = arith.constant 0 : index
    %c0_12 = arith.constant 0 : index
    %c0_13 = arith.constant 0 : index
    %c0_14 = arith.constant 0 : index
    %22 = vector.load %arg6[%c0_11, %c0_12, %c0_13, %c0_14] : memref<1x4x8x8xf32, #tpu.memory_space<vmem>>, vector<1x1x8x8xf32>
    %23 = vector.shape_cast %22 : vector<1x1x8x8xf32> to vector<8x8xf32>
    %24 = vector.shape_cast %21 : vector<8x8xf32> to vector<1x1x8x8xf32>
    tpu.vector_store %arg6[%c0_11, %c0_12, %c0_13, %c0_14], %24 {strides = array<i32>} : memref<1x4x8x8xf32, #tpu.memory_space<vmem>>, vector<1x1x8x8xf32>,
    %cst_15 = arith.constant dense<0.000000e+00> : vector<8x32xf32>
    %25 = tpu.matmul %21, %10, %cst_15 {dimension_numbers = #tpu.dot_dimension_numbers<[1], [0], [0], [1], [0, 0, 1, 1], [], []>} : vector<8x8xf32>, vector<8x32xf32>, vector<8x32xf32> -> vector<8x32xf32>
    %c0_16 = arith.constant 0 : index
    %c0_17 = arith.constant 0 : index
    %c0_18 = arith.constant 0 : index
    %26 = vector.load %arg5[%c0_16, %c0_17, %c0_18] : memref<1x8x128xf32, #tpu.memory_space<vmem>>, vector<1x8x32xf32>
    %27 = vector.shape_cast %26 : vector<1x8x32xf32> to vector<8x32xf32>
    %28 = vector.shape_cast %25 : vector<8x32xf32> to vector<1x8x32xf32>
    tpu.vector_store %arg5[%c0_16, %c0_17, %c0_18], %28 {strides = array<i32>} : memref<1x8x128xf32, #tpu.memory_space<vmem>>, vector<1x8x32xf32>,
    %29 = vector.extract_strided_slice %3 {offsets = [0, 32], sizes = [8, 32], strides = [1, 1]} : vector<8x128xf32> to vector<8x32xf32>
    %30 = vector.extract_strided_slice %5 {offsets = [0, 32], sizes = [8, 32], strides = [1, 1]} : vector<8x128xf32> to vector<8x32xf32>
    %31 = vector.extract_strided_slice %7 {offsets = [0, 32], sizes = [8, 32], strides = [1, 1]} : vector<8x128xf32> to vector<8x32xf32>
    %cst_19 = arith.constant dense<0.000000e+00> : vector<8x8xf32>
    %32 = tpu.matmul %29, %30, %cst_19 {dimension_numbers = #tpu.dot_dimension_numbers<[1], [1], [0], [0], [0, 0, 1, 0], [], []>} : vector<8x32xf32>, vector<8x32xf32>, vector<8x8xf32> -> vector<8x8xf32>
    %cst_20 = arith.constant dense<0xFF800000> : vector<8xf32>
    %33 = vector.multi_reduction <maximumf>, %32, %cst_20 [1] : vector<8x8xf32> to vector<8xf32>
    %34 = vector.shape_cast %33 : vector<8xf32> to vector<8x1xf32>
    %35 = vector.broadcast %34 : vector<8x1xf32> to vector<8x8xf32>
    %36 = arith.subf %32, %35 : vector<8x8xf32>
    %37 = math.exp %36 : vector<8x8xf32>
    %cst_21 = arith.constant dense<0.000000e+00> : vector<8xf32>
    %38 = vector.multi_reduction <add>, %37, %cst_21 [1] : vector<8x8xf32> to vector<8xf32>
    %39 = vector.shape_cast %38 : vector<8xf32> to vector<8x1xf32>
    %40 = tpu.reciprocal %39 : vector<8x1xf32> -> vector<8x1xf32>
    %41 = vector.broadcast %40 : vector<8x1xf32> to vector<8x8xf32>
    %42 = arith.mulf %37, %41 : vector<8x8xf32>
    %c0_22 = arith.constant 0 : index
    %c1 = arith.constant 1 : index
    %c0_23 = arith.constant 0 : index
    %c0_24 = arith.constant 0 : index
    %43 = vector.load %arg6[%c0_22, %c1, %c0_23, %c0_24] : memref<1x4x8x8xf32, #tpu.memory_space<vmem>>, vector<1x1x8x8xf32>
    %44 = vector.shape_cast %43 : vector<1x1x8x8xf32> to vector<8x8xf32>
    %45 = vector.shape_cast %42 : vector<8x8xf32> to vector<1x1x8x8xf32>
    tpu.vector_store %arg6[%c0_22, %c1, %c0_23, %c0_24], %45 {strides = array<i32>} : memref<1x4x8x8xf32, #tpu.memory_space<vmem>>, vector<1x1x8x8xf32>,
    %cst_25 = arith.constant dense<0.000000e+00> : vector<8x32xf32>
    %46 = tpu.matmul %42, %31, %cst_25 {dimension_numbers = #tpu.dot_dimension_numbers<[1], [0], [0], [1], [0, 0, 1, 1], [], []>} : vector<8x8xf32>, vector<8x32xf32>, vector<8x32xf32> -> vector<8x32xf32>
    %c0_26 = arith.constant 0 : index
    %c0_27 = arith.constant 0 : index
    %c32 = arith.constant 32 : index
    %47 = vector.load %arg5[%c0_26, %c0_27, %c32] : memref<1x8x128xf32, #tpu.memory_space<vmem>>, vector<1x8x32xf32>
    %48 = vector.shape_cast %47 : vector<1x8x32xf32> to vector<8x32xf32>
    %49 = vector.shape_cast %46 : vector<8x32xf32> to vector<1x8x32xf32>
    tpu.vector_store %arg5[%c0_26, %c0_27, %c32], %49 {strides = array<i32>} : memref<1x8x128xf32, #tpu.memory_space<vmem>>, vector<1x8x32xf32>,
    %50 = vector.extract_strided_slice %3 {offsets = [0, 64], sizes = [8, 32], strides = [1, 1]} : vector<8x128xf32> to vector<8x32xf32>
    %51 = vector.extract_strided_slice %5 {offsets = [0, 64], sizes = [8, 32], strides = [1, 1]} : vector<8x128xf32> to vector<8x32xf32>
    %52 = vector.extract_strided_slice %7 {offsets = [0, 64], sizes = [8, 32], strides = [1, 1]} : vector<8x128xf32> to vector<8x32xf32>
    %cst_28 = arith.constant dense<0.000000e+00> : vector<8x8xf32>
    %53 = tpu.matmul %50, %51, %cst_28 {dimension_numbers = #tpu.dot_dimension_numbers<[1], [1], [0], [0], [0, 0, 1, 0], [], []>} : vector<8x32xf32>, vector<8x32xf32>, vector<8x8xf32> -> vector<8x8xf32>
    %cst_29 = arith.constant dense<0xFF800000> : vector<8xf32>
    %54 = vector.multi_reduction <maximumf>, %53, %cst_29 [1] : vector<8x8xf32> to vector<8xf32>
    %55 = vector.shape_cast %54 : vector<8xf32> to vector<8x1xf32>
    %56 = vector.broadcast %55 : vector<8x1xf32> to vector<8x8xf32>
    %57 = arith.subf %53, %56 : vector<8x8xf32>
    %58 = math.exp %57 : vector<8x8xf32>
    %cst_30 = arith.constant dense<0.000000e+00> : vector<8xf32>
    %59 = vector.multi_reduction <add>, %58, %cst_30 [1] : vector<8x8xf32> to vector<8xf32>
    %60 = vector.shape_cast %59 : vector<8xf32> to vector<8x1xf32>
    %61 = tpu.reciprocal %60 : vector<8x1xf32> -> vector<8x1xf32>
    %62 = vector.broadcast %61 : vector<8x1xf32> to vector<8x8xf32>
    %63 = arith.mulf %58, %62 : vector<8x8xf32>
    %c0_31 = arith.constant 0 : index
    %c2 = arith.constant 2 : index
    %c0_32 = arith.constant 0 : index
    %c0_33 = arith.constant 0 : index
    %64 = vector.load %arg6[%c0_31, %c2, %c0_32, %c0_33] : memref<1x4x8x8xf32, #tpu.memory_space<vmem>>, vector<1x1x8x8xf32>
    %65 = vector.shape_cast %64 : vector<1x1x8x8xf32> to vector<8x8xf32>
    %66 = vector.shape_cast %63 : vector<8x8xf32> to vector<1x1x8x8xf32>
    tpu.vector_store %arg6[%c0_31, %c2, %c0_32, %c0_33], %66 {strides = array<i32>} : memref<1x4x8x8xf32, #tpu.memory_space<vmem>>, vector<1x1x8x8xf32>,
    %cst_34 = arith.constant dense<0.000000e+00> : vector<8x32xf32>
    %67 = tpu.matmul %63, %52, %cst_34 {dimension_numbers = #tpu.dot_dimension_numbers<[1], [0], [0], [1], [0, 0, 1, 1], [], []>} : vector<8x8xf32>, vector<8x32xf32>, vector<8x32xf32> -> vector<8x32xf32>
    %c0_35 = arith.constant 0 : index
    %c0_36 = arith.constant 0 : index
    %c64 = arith.constant 64 : index
    %68 = vector.load %arg5[%c0_35, %c0_36, %c64] : memref<1x8x128xf32, #tpu.memory_space<vmem>>, vector<1x8x32xf32>
    %69 = vector.shape_cast %68 : vector<1x8x32xf32> to vector<8x32xf32>
    %70 = vector.shape_cast %67 : vector<8x32xf32> to vector<1x8x32xf32>
    tpu.vector_store %arg5[%c0_35, %c0_36, %c64], %70 {strides = array<i32>} : memref<1x8x128xf32, #tpu.memory_space<vmem>>, vector<1x8x32xf32>,
    %71 = vector.extract_strided_slice %3 {offsets = [0, 96], sizes = [8, 32], strides = [1, 1]} : vector<8x128xf32> to vector<8x32xf32>
    %72 = vector.extract_strided_slice %5 {offsets = [0, 96], sizes = [8, 32], strides = [1, 1]} : vector<8x128xf32> to vector<8x32xf32>
    %73 = vector.extract_strided_slice %7 {offsets = [0, 96], sizes = [8, 32], strides = [1, 1]} : vector<8x128xf32> to vector<8x32xf32>
    %cst_37 = arith.constant dense<0.000000e+00> : vector<8x8xf32>
    %74 = tpu.matmul %71, %72, %cst_37 {dimension_numbers = #tpu.dot_dimension_numbers<[1], [1], [0], [0], [0, 0, 1, 0], [], []>} : vector<8x32xf32>, vector<8x32xf32>, vector<8x8xf32> -> vector<8x8xf32>
    %cst_38 = arith.constant dense<0xFF800000> : vector<8xf32>
    %75 = vector.multi_reduction <maximumf>, %74, %cst_38 [1] : vector<8x8xf32> to vector<8xf32>
    %76 = vector.shape_cast %75 : vector<8xf32> to vector<8x1xf32>
    %77 = vector.broadcast %76 : vector<8x1xf32> to vector<8x8xf32>
    %78 = arith.subf %74, %77 : vector<8x8xf32>
    %79 = math.exp %78 : vector<8x8xf32>
    %cst_39 = arith.constant dense<0.000000e+00> : vector<8xf32>
    %80 = vector.multi_reduction <add>, %79, %cst_39 [1] : vector<8x8xf32> to vector<8xf32>
    %81 = vector.shape_cast %80 : vector<8xf32> to vector<8x1xf32>
    %82 = tpu.reciprocal %81 : vector<8x1xf32> -> vector<8x1xf32>
    %83 = vector.broadcast %82 : vector<8x1xf32> to vector<8x8xf32>
    %84 = arith.mulf %79, %83 : vector<8x8xf32>
    %c0_40 = arith.constant 0 : index
    %c3 = arith.constant 3 : index
    %c0_41 = arith.constant 0 : index
    %c0_42 = arith.constant 0 : index
    %85 = vector.load %arg6[%c0_40, %c3, %c0_41, %c0_42] : memref<1x4x8x8xf32, #tpu.memory_space<vmem>>, vector<1x1x8x8xf32>
    %86 = vector.shape_cast %85 : vector<1x1x8x8xf32> to vector<8x8xf32>
    %87 = vector.shape_cast %84 : vector<8x8xf32> to vector<1x1x8x8xf32>
    tpu.vector_store %arg6[%c0_40, %c3, %c0_41, %c0_42], %87 {strides = array<i32>} : memref<1x4x8x8xf32, #tpu.memory_space<vmem>>, vector<1x1x8x8xf32>,
    %cst_43 = arith.constant dense<0.000000e+00> : vector<8x32xf32>
    %88 = tpu.matmul %84, %73, %cst_43 {dimension_numbers = #tpu.dot_dimension_numbers<[1], [0], [0], [1], [0, 0, 1, 1], [], []>} : vector<8x8xf32>, vector<8x32xf32>, vector<8x32xf32> -> vector<8x32xf32>
    %c0_44 = arith.constant 0 : index
    %c0_45 = arith.constant 0 : index
    %c96 = arith.constant 96 : index
    %89 = vector.load %arg5[%c0_44, %c0_45, %c96] : memref<1x8x128xf32, #tpu.memory_space<vmem>>, vector<1x8x32xf32>
    %90 = vector.shape_cast %89 : vector<1x8x32xf32> to vector<8x32xf32>
    %91 = vector.shape_cast %88 : vector<8x32xf32> to vector<1x8x32xf32>
    tpu.vector_store %arg5[%c0_44, %c0_45, %c96], %91 {strides = array<i32>} : memref<1x8x128xf32, #tpu.memory_space<vmem>>, vector<1x8x32xf32>,
    return
  }
  func.func @transform_0(%arg0: i32, %arg1: i32) -> (i32, i32, i32) {
    %c0_i32 = arith.constant 0 : i32
    %c0_i32_0 = arith.constant 0 : i32
    return %arg0, %arg1, %c0_i32 : i32, i32, i32
  }
  func.func @transform_1(%arg0: i32, %arg1: i32) -> (i32, i32, i32) {
    %c0_i32 = arith.constant 0 : i32
    %c0_i32_0 = arith.constant 0 : i32
    %c0_i32_1 = arith.constant 0 : i32
    return %arg0, %c0_i32, %c0_i32_0 : i32, i32, i32
  }
  func.func @transform_2(%arg0: i32, %arg1: i32) -> (i32, i32, i32) {
    %c0_i32 = arith.constant 0 : i32
    %c0_i32_0 = arith.constant 0 : i32
    %c0_i32_1 = arith.constant 0 : i32
    return %arg0, %c0_i32, %c0_i32_0 : i32, i32, i32
  }
  func.func @transform_3(%arg0: i32, %arg1: i32) -> (i32, i32, i32) {
    %c0_i32 = arith.constant 0 : i32
    %c0_i32_0 = arith.constant 0 : i32
    return %arg0, %arg1, %c0_i32 : i32, i32, i32
  }
  func.func @transform_4(%arg0: i32, %arg1: i32) -> (i32, i32, i32, i32) {
    %c0_i32 = arith.constant 0 : i32
    %c0_i32_0 = arith.constant 0 : i32
    %c0_i32_1 = arith.constant 0 : i32
    return %arg0, %c0_i32, %arg1, %c0_i32_0 : i32, i32, i32, i32
  }
}

</mosaic_0001>

<llo_original>
// kernel: tpu_custom_call.1
$region0: #{tpu_custom_call.1}
  #allocation0 [shape = 'u32[]', space=smem, size = 0x4, offset = 0x4, fixed_abs, tag = 'smem constant byte address 0x4 - core index']
  #allocation1 [shape = 'u32[144,128]{1,0:T(1,128)}', space=vmem, size = 0x12000, scoped, tag = 'internal scratch']
  %s0 = inlined_call_operand.hbm [shape: f32[2,8,128], index: 0, kind: input, shape index: {}]
  %s1 = inlined_call_operand.hbm [shape: f32[2,8,128], index: 1, kind: input, shape index: {}]
  %s2 = inlined_call_operand.hbm [shape: f32[2,8,128], index: 2, kind: input, shape index: {}]
  %s3 = inlined_call_operand.hbm [shape: f32[2,8,128], index: 3, kind: output, shape index: {0}]
  %s4 = inlined_call_operand.hbm [shape: f32[2,4,8,8], index: 4, kind: output, shape index: {1}]
  %5 = xla_tuple %s3, %s4
  %s6 = sld [smem:[#allocation0]]
  $region65: #{tpu_custom_call.1} parent=0
    _
  %s8 = ssub.s32 1, %s6
  %s9 = scalar_select 0, %s8, %s6
  $region1: #{tpu_custom_call.1} parent=0
    #allocation2 [shape = 'u8[8192]{0}', space=vmem, size = 0x2000, scoped, tag = 'input window, operand 0']
    #allocation3 [shape = 's32[2]{0}', space=sflag, size = 0x8, scoped, tag = 'scoped memory for tpu_custom_call.1']
    #allocation4 [shape = 's32[2]{0}', space=sflag, size = 0x8, scoped, tag = 'scoped memory for tpu_custom_call.1']
    #allocation5 [shape = 'u8[8192]{0}', space=vmem, size = 0x2000, scoped, tag = 'input window, operand 1']
    #allocation6 [shape = 's32[2]{0}', space=sflag, size = 0x8, scoped, tag = 'scoped memory for tpu_custom_call.1']
    #allocation7 [shape = 'u8[8192]{0}', space=vmem, size = 0x2000, scoped, tag = 'input window, operand 2']
    #allocation8 [shape = 'u8[8192]{0}', space=vmem, size = 0x2000, scoped, tag = 'output window, operand 0']
    #allocation9 [shape = 'u8[32768]{0}', space=vmem, size = 0x8000, scoped, tag = 'output window, operand 1']
    #allocation10 [shape = 's32[2]{0}', space=sflag, size = 0x8, scoped, tag = 'scoped memory for tpu_custom_call.1']
    %10 = vsyncpa [#allocation3], 0
    %s11 = scalar_lea.sflag [#allocation3], 1
    %12 = vsyncpa %s11, 0
    %13 = vsyncpa [#allocation6], 0
    %s14 = scalar_lea.sflag [#allocation6], 1
    %15 = vsyncpa %s14, 0
    %16 = vsyncpa [#allocation4], 0
    %s17 = scalar_lea.sflag [#allocation4], 1
    %18 = vsyncpa %s17, 0
    %19 = vsyncpa [#allocation10], 0
    %s20 = scalar_lea.sflag [#allocation10], 1
    %21 = vsyncpa %s20, 0
    loop: start=0, step=1, limit=4
    $region2: #{tpu_custom_call.1} parent=1 // loop_pre_header
      _
    $region3: #{tpu_custom_call.1} parent=1 // loop_header
      %s23 = sphi 0, %s27
      %p24 = scmp.ge.s32.totalorder %s23, 4
      %s30 = sphi 0, %s42
      %s31 = sphi 0, %s38
      %s32 = sphi 0, %s30
      %s33 = sphi 0, %s31
      %s34 = sphi 0, %s32
      %s35 = sphi 0, %s33
      %s47 = sphi 0, %s49
      %s50 = sphi 0, %s47
      %s51 = sphi 0, %s50
      %s67 = sphi 0, %s51
      %s73 = sphi 0, %s75
      %s76 = sphi 0, %s73
      %s77 = sphi 0, %s76
      %s93 = sphi 0, %s77
      %s99 = sphi 0, %s101
      %s102 = sphi 0, %s99
      %s103 = sphi 0, %s102
      %s119 = sphi 0, %s103
      %s127 = sphi 0, %s129
      %s130 = sphi 0, %s127
      %s131 = sphi 0, %s130
      %s147 = sphi 0, %s131
      %s155 = sphi 0, %s157
      %s158 = sphi 0, %s155
      %s159 = sphi 0, %s158
      %s175 = sphi 0, %s159
    $region4: #{tpu_custom_call.1} parent=1 // loop_header_branch
      %26 = sbr.rel (%p24) target = $region8
    $region5: #{tpu_custom_call.1} parent=1 // loop_body
      %s28 = ssub.s32 %s23, 1
      %s29 = ssub.s32 %s23, 2
      %s36 = sadd.s32 1, %s31
      %p37 = scmp.ge.s32.totalorder %s36, 1
      %s38 = scalar_select %p37, 0, %s36
      %s39 = sadd.s32 1, %s30
      %s40 = scalar_select %p37, %s39, %s30
      %p41 = scmp.ge.s32.totalorder %s40, 2
      %s42 = scalar_select %p41, 0, %s40
      %s43 = ssub.s32 %s30, %s42
      %s44 = ssub.s32 %s31, %s38
      %s45 = sor.u32 %s43, %s44
      %p46 = scmp.eq.s32.totalorder %s45, 0
      %s48 = sadd.s32 %s47, 1
      %s49 = scalar_select %p46, %s47, %s48
      %p52 = pneg %p46
      %p53 = scmp.eq.s32.totalorder %s23, 1
      %p54 = por %p52, %p53
      %p55 = scmp.ne.s32.totalorder %s47, %s50
      %p56 = scmp.eq.s32.totalorder %s23, 0
      %p57 = por %p55, %p56
      %p58 = scmp.ne.s32.totalorder %s47, %s50
      %p59 = scmp.eq.s32.totalorder %s28, 1
      %p60 = por %p58, %p59
      %p61 = scmp.ne.s32.totalorder %s50, %s51
      %p62 = scmp.eq.s32.totalorder %s28, 0
      %p63 = por %p61, %p62
      %p64 = scmp.ne.s32.totalorder %s50, %s51
      %p65 = scmp.eq.s32.totalorder %s29, 1
      %p66 = por %p64, %p65
      %p68 = scmp.ne.s32.totalorder %s51, %s67
      %p69 = scmp.eq.s32.totalorder %s29, 0
      %p70 = por %p68, %p69
      %s71 = ssub.s32 %s30, %s42
      %p72 = scmp.eq.s32.totalorder %s71, 0
      %s74 = sadd.s32 %s73, 1
      %s75 = scalar_select %p72, %s73, %s74
      %p78 = pneg %p72
      %p79 = scmp.eq.s32.totalorder %s23, 1
      %p80 = por %p78, %p79
      %p81 = scmp.ne.s32.totalorder %s73, %s76
      %p82 = scmp.eq.s32.totalorder %s23, 0
      %p83 = por %p81, %p82
      %p84 = scmp.ne.s32.totalorder %s73, %s76
      %p85 = scmp.eq.s32.totalorder %s28, 1
      %p86 = por %p84, %p85
      %p87 = scmp.ne.s32.totalorder %s76, %s77
      %p88 = scmp.eq.s32.totalorder %s28, 0
      %p89 = por %p87, %p88
      %p90 = scmp.ne.s32.totalorder %s76, %s77
      %p91 = scmp.eq.s32.totalorder %s29, 1
      %p92 = por %p90, %p91
      %p94 = scmp.ne.s32.totalorder %s77, %s93
      %p95 = scmp.eq.s32.totalorder %s29, 0
      %p96 = por %p94, %p95
      %s97 = ssub.s32 %s30, %s42
      %p98 = scmp.eq.s32.totalorder %s97, 0
      %s100 = sadd.s32 %s99, 1
      %s101 = scalar_select %p98, %s99, %s100
      %p104 = pneg %p98
      %p105 = scmp.eq.s32.totalorder %s23, 1
      %p106 = por %p104, %p105
      %p107 = scmp.ne.s32.totalorder %s99, %s102
      %p108 = scmp.eq.s32.totalorder %s23, 0
      %p109 = por %p107, %p108
      %p110 = scmp.ne.s32.totalorder %s99, %s102
      %p111 = scmp.eq.s32.totalorder %s28, 1
      %p112 = por %p110, %p111
      %p113 = scmp.ne.s32.totalorder %s102, %s103
      %p114 = scmp.eq.s32.totalorder %s28, 0
      %p115 = por %p113, %p114
      %p116 = scmp.ne.s32.totalorder %s102, %s103
      %p117 = scmp.eq.s32.totalorder %s29, 1
      %p118 = por %p116, %p117
      %p120 = scmp.ne.s32.totalorder %s103, %s119
      %p121 = scmp.eq.s32.totalorder %s29, 0
      %p122 = por %p120, %p121
      %s123 = ssub.s32 %s30, %s42
      %s124 = ssub.s32 %s31, %s38
      %s125 = sor.u32 %s123, %s124
      %p126 = scmp.eq.s32.totalorder %s125, 0
      %s128 = sadd.s32 %s127, 1
      %s129 = scalar_select %p126, %s127, %s128
      %p132 = pneg %p126
      %p133 = scmp.eq.s32.totalorder %s23, 1
      %p134 = por %p132, %p133
      %p135 = scmp.ne.s32.totalorder %s127, %s130
      %p136 = scmp.eq.s32.totalorder %s23, 0
      %p137 = por %p135, %p136
      %p138 = scmp.ne.s32.totalorder %s127, %s130
      %p139 = scmp.eq.s32.totalorder %s28, 1
      %p140 = por %p138, %p139
      %p141 = scmp.ne.s32.totalorder %s130, %s131
      %p142 = scmp.eq.s32.totalorder %s28, 0
      %p143 = por %p141, %p142
      %p144 = scmp.ne.s32.totalorder %s130, %s131
      %p145 = scmp.eq.s32.totalorder %s29, 1
      %p146 = por %p144, %p145
      %p148 = scmp.ne.s32.totalorder %s131, %s147
      %p149 = scmp.eq.s32.totalorder %s29, 0
      %p150 = por %p148, %p149
      %s151 = ssub.s32 %s30, %s42
      %s152 = ssub.s32 %s31, %s38
      %s153 = sor.u32 %s151, %s152
      %p154 = scmp.eq.s32.totalorder %s153, 0
      %s156 = sadd.s32 %s155, 1
      %s157 = scalar_select %p154, %s155, %s156
      %p160 = pneg %p154
      %p161 = scmp.eq.s32.totalorder %s23, 1
      %p162 = por %p160, %p161
      %p163 = scmp.ne.s32.totalorder %s155, %s158
      %p164 = scmp.eq.s32.totalorder %s23, 0
      %p165 = por %p163, %p164
      %p166 = scmp.ne.s32.totalorder %s155, %s158
      %p167 = scmp.eq.s32.totalorder %s28, 1
      %p168 = por %p166, %p167
      %p169 = scmp.ne.s32.totalorder %s158, %s159
      %p170 = scmp.eq.s32.totalorder %s28, 0
      %p171 = por %p169, %p170
      %p172 = scmp.ne.s32.totalorder %s158, %s159
      %p173 = scmp.eq.s32.totalorder %s29, 1
      %p174 = por %p172, %p173
      %p176 = scmp.ne.s32.totalorder %s159, %s175
      %p177 = scmp.eq.s32.totalorder %s29, 0
      %p178 = por %p176, %p177
      %p179 = scmp.le.s32.totalorder 1, %s23
      %p180 = scmp.lt.s32.totalorder %s23, 3
      %p181 = pnand %p179, %p180
      %p182 = pneg %p181
      // Predicated region
      $region9: #{tpu_custom_call.1} parent=5 // pred_check
        _
      $region10: #{tpu_custom_call.1} parent=5 // pred_check_branch
        %184 = sbr.rel (%p181) target = $region12
      $region11: #{tpu_custom_call.1} parent=5 // pred_region
        %s185 = ssub.s32 %s23, 1
      $region12: #{tpu_custom_call.1} parent=5 // pred_fallthru
        _
      %p186 = scmp.lt.s32.totalorder %s23, 2
      // Predicated region
      $region13: #{tpu_custom_call.1} parent=5 // pred_check
        %p187 = pneg %p186
      $region14: #{tpu_custom_call.1} parent=5 // pred_check_branch
        %189 = sbr.rel (%p187) target = $region16
      $region15: #{tpu_custom_call.1} parent=5 // pred_region
        // Predicated region
        $region17: #{tpu_custom_call.1} parent=15 // pred_check
          %p190 = pneg %p57
        $region18: #{tpu_custom_call.1} parent=15 // pred_check_branch
          %192 = sbr.rel (%p190) target = $region20
        $region19: #{tpu_custom_call.1} parent=15 // pred_region
          %s193 = sand.u32 %s47, 1
          %s194 = scalar_lea.sflag [#allocation3], %s193
          %s195 = sand.u32 %s47, 1
          %s196 = smul.addr %s195, 8
          %s197 = scalar_lea.vmem [#allocation2], %s196
          %s199 = ssub.s32 128, 128
          %200 = vsyncadd %s194, %s199
          %s201 = sadd.s32 %s31, %s30
          %s202 = smul.addr %s201, 128
          %s203 = scalar_lea.hbm %s0, %s202
          %s205 = sshll.u32 %s197, 4
          %s206 = int_to_ptr.vmem [resolvable:$true] %s205
          %208 = dma.hbm_to_vmem [thread:$0]  %s203, 128, %s206, %s194
        $region20: #{tpu_custom_call.1} parent=15 // pred_fallthru
          _
        // Predicated region
        $region21: #{tpu_custom_call.1} parent=15 // pred_check
          %p209 = pneg %p83
        $region22: #{tpu_custom_call.1} parent=15 // pred_check_branch
          %211 = sbr.rel (%p209) target = $region24
        $region23: #{tpu_custom_call.1} parent=15 // pred_region
          %s212 = sand.u32 %s23, 1
          %s213 = scalar_lea.sflag [#allocation6], %s212
          %s214 = sand.u32 %s73, 1
          %s215 = smul.addr %s214, 8
          %s216 = scalar_lea.vmem [#allocation5], %s215
          %s218 = ssub.s32 128, 128
          %219 = vsyncadd %s213, %s218
          %s220 = smul.addr %s30, 128
          %s221 = scalar_lea.hbm %s1, %s220
          %s223 = sshll.u32 %s216, 4
          %s224 = int_to_ptr.vmem [resolvable:$true] %s223
          %226 = dma.hbm_to_vmem [thread:$0]  %s221, 128, %s224, %s213
        $region24: #{tpu_custom_call.1} parent=15 // pred_fallthru
          _
        // Predicated region
        $region25: #{tpu_custom_call.1} parent=15 // pred_check
          %p227 = pneg %p109
        $region26: #{tpu_custom_call.1} parent=15 // pred_check_branch
          %229 = sbr.rel (%p227) target = $region28
        $region27: #{tpu_custom_call.1} parent=15 // pred_region
          %s230 = sand.u32 %s23, 1
          %s231 = scalar_lea.sflag [#allocation6], %s230
          %s232 = sand.u32 %s99, 1
          %s233 = smul.addr %s232, 8
          %s234 = scalar_lea.vmem [#allocation7], %s233
          %s236 = ssub.s32 128, 128
          %237 = vsyncadd %s231, %s236
          %s238 = smul.addr %s30, 128
          %s239 = scalar_lea.hbm %s2, %s238
          %s241 = sshll.u32 %s234, 4
          %s242 = int_to_ptr.vmem [resolvable:$true] %s241
          %244 = dma.hbm_to_vmem [thread:$0]  %s239, 128, %s242, %s231
        $region28: #{tpu_custom_call.1} parent=15 // pred_fallthru
          _
      $region16: #{tpu_custom_call.1} parent=5 // pred_fallthru
        _
      %p245 = scmp.le.s32.totalorder 1, %s23
      %p246 = scmp.lt.s32.totalorder %s23, 3
      %p247 = pnand %p245, %p246
      %p248 = pneg %p247
      // Predicated region
      $region29: #{tpu_custom_call.1} parent=5 // pred_check
        _
      $region30: #{tpu_custom_call.1} parent=5 // pred_check_branch
        %250 = sbr.rel (%p247) target = $region32
      $region31: #{tpu_custom_call.1} parent=5 // pred_region
        %s251 = ssub.s32 %s23, 1
        %s252 = sand.u32 %s50, 1
        %s253 = scalar_lea.sflag [#allocation3], %s252
        %s254 = sand.u32 %s50, 1
        %s255 = smul.addr %s254, 8
        %s256 = scalar_lea.vmem [#allocation2], %s255
        // Predicated region
        $region33: #{tpu_custom_call.1} parent=31 // pred_check
          %p257 = pneg %p63
        $region34: #{tpu_custom_call.1} parent=31 // pred_check_branch
          %259 = sbr.rel (%p257) target = $region36
        $region35: #{tpu_custom_call.1} parent=31 // pred_region
          %260 = dma.done %s253, 128
        $region36: #{tpu_custom_call.1} parent=31 // pred_fallthru
          _
        %s261 = sand.u32 %s28, 1
        %s262 = scalar_lea.sflag [#allocation6], %s261
        %s263 = sand.u32 %s76, 1
        %s264 = smul.addr %s263, 8
        %s265 = scalar_lea.vmem [#allocation5], %s264
        // Predicated region
        $region37: #{tpu_custom_call.1} parent=31 // pred_check
          %p266 = pneg %p89
        $region38: #{tpu_custom_call.1} parent=31 // pred_check_branch
          %268 = sbr.rel (%p266) target = $region40
        $region39: #{tpu_custom_call.1} parent=31 // pred_region
          %269 = dma.done %s262, 128
        $region40: #{tpu_custom_call.1} parent=31 // pred_fallthru
          _
        %s270 = sand.u32 %s28, 1
        %s271 = scalar_lea.sflag [#allocation6], %s270
        %s272 = sand.u32 %s102, 1
        %s273 = smul.addr %s272, 8
        %s274 = scalar_lea.vmem [#allocation7], %s273
        // Predicated region
        $region41: #{tpu_custom_call.1} parent=31 // pred_check
          %p275 = pneg %p115
        $region42: #{tpu_custom_call.1} parent=31 // pred_check_branch
          %277 = sbr.rel (%p275) target = $region44
        $region43: #{tpu_custom_call.1} parent=31 // pred_region
          %278 = dma.done %s271, 128
        $region44: #{tpu_custom_call.1} parent=31 // pred_fallthru
          _
        %s279 = sand.u32 %s50, 1
        %s280 = scalar_lea.sflag [#allocation3], %s279
        %s281 = sand.u32 %s50, 1
        %s282 = smul.addr %s281, 8
        %s283 = scalar_lea.vmem [#allocation2], %s282
        %p284 = pneg %p63
        %p285 = pneg %p60
        %s286 = sand.u32 %s28, 1
        %s287 = scalar_lea.sflag [#allocation6], %s286
        %s288 = sand.u32 %s76, 1
        %s289 = smul.addr %s288, 8
        %s290 = scalar_lea.vmem [#allocation5], %s289
        %p291 = pneg %p89
        %p292 = pneg %p86
        %s293 = sand.u32 %s28, 1
        %s294 = scalar_lea.sflag [#allocation6], %s293
        %s295 = sand.u32 %s102, 1
        %s296 = smul.addr %s295, 8
        %s297 = scalar_lea.vmem [#allocation7], %s296
        %p298 = pneg %p115
        %p299 = pneg %p112
        %p300 = pneg %p143
        %p301 = pneg %p140
        %s302 = sand.u32 %s130, 1
        %s303 = scalar_lea.sflag [#allocation4], %s302
        %s304 = sand.u32 %s130, 1
        %s305 = smul.addr %s304, 8
        %s306 = scalar_lea.vmem [#allocation8], %s305
        %p307 = pneg %p171
        %p308 = pneg %p168
        %s309 = sand.u32 %s158, 1
        %s310 = scalar_lea.sflag [#allocation10], %s309
        %s311 = sand.u32 %s158, 1
        %s312 = smul.addr %s311, 32
        %s313 = scalar_lea.vmem [#allocation9], %s312
        %v314 = vld [vmem:[%s256] sm:$0xff]
        %v315 = vmul.f32 %v314, 0.17677669
        %v316 = vld [vmem:[%s265] sm:$0xff]
        %v317 = vld [vmem:[%s274] sm:$0xff]
        %vm318 = vcmask 261120
        %v320 = vsel %vm318, %v315, 0
        %v323 = vsel %vm318, %v316, 0
        %325 = vmatprep.subr.mxu0 0.0
        %326 = vmatpush1.xpose.msra.mxu0 0.0
        %327 = vmatprep.subr.mxu0 0.0
        %328 = vmatpush1.xpose.msra.mxu0 0.0
        %329 = vmatprep.subr.mxu0 0.0
        %330 = vmatpush1.xpose.msra.mxu0 0.0
        %331 = vmatprep.subr.mxu0 0.0
        %332 = vmatpush1.xpose.msra.mxu0 0.0
        %333 = vmatprep.subr.mxu0 0.0
        %334 = vmatpush1.xpose.msra.mxu0 0.0
        %335 = vmatprep.subr.mxu0 0.0
        %336 = vmatpush1.xpose.msra.mxu0 0.0
        %337 = vmatprep.subr.mxu0 0.0
        %338 = vmatpush1.xpose.msra.mxu0 0.0
        %339 = vmatprep.subr.mxu0 0.0
        %340 = vmatpush1.xpose.msra.mxu0 0.0
        %341 = vmatprep.subr.mxu0 0.0
        %342 = vmatpush1.xpose.msra.mxu0 0.0
        %343 = vmatprep.subr.mxu0 0.0
        %344 = vmatpush1.xpose.msra.mxu0 0.0
        %345 = vmatprep.subr.mxu0 0.0
        %346 = vmatpush1.xpose.msra.mxu0 0.0
        %347 = vmatprep.subr.mxu0 0.0
        %348 = vmatpush1.xpose.msra.mxu0 0.0
        %349 = vmatprep.subr.mxu0 0.0
        %350 = vmatpush1.xpose.msra.mxu0 0.0
        %351 = vmatprep.subr.mxu0 0.0
        %352 = vmatpush1.xpose.msra.mxu0 0.0
        %353 = vmatprep.subr.mxu0 0.0
        %354 = vmatpush1.xpose.msra.mxu0 0.0
        %355 = vmatprep.subr.mxu0 0.0
        %356 = vmatpush1.xpose.msra.mxu0 %v323
        %357 = vmatprep.subr.mxu0 0.0
        %358 = vmatpush2.xpose.msra.mxu0 0.0
        %359 = vmatprep.subr.mxu0 0.0
        %360 = vmatpush2.xpose.msra.mxu0 0.0
        %361 = vmatprep.subr.mxu0 0.0
        %362 = vmatpush2.xpose.msra.mxu0 0.0
        %363 = vmatprep.subr.mxu0 0.0
        %364 = vmatpush2.xpose.msra.mxu0 0.0
        %365 = vmatprep.subr.mxu0 0.0
        %366 = vmatpush2.xpose.msra.mxu0 0.0
        %367 = vmatprep.subr.mxu0 0.0
        %368 = vmatpush2.xpose.msra.mxu0 0.0
        %369 = vmatprep.subr.mxu0 0.0
        %370 = vmatpush2.xpose.msra.mxu0 0.0
        %371 = vmatprep.subr.mxu0 0.0
        %372 = vmatpush2.xpose.msra.mxu0 0.0
        %373 = vmatprep.subr.mxu0 0.0
        %374 = vmatpush2.xpose.msra.mxu0 0.0
        %375 = vmatprep.subr.mxu0 0.0
        %376 = vmatpush2.xpose.msra.mxu0 0.0
        %377 = vmatprep.subr.mxu0 0.0
        %378 = vmatpush2.xpose.msra.mxu0 0.0
        %379 = vmatprep.subr.mxu0 0.0
        %380 = vmatpush2.xpose.msra.mxu0 0.0
        %381 = vmatprep.subr.mxu0 0.0
        %382 = vmatpush2.xpose.msra.mxu0 0.0
        %383 = vmatprep.subr.mxu0 0.0
        %384 = vmatpush2.xpose.msra.mxu0 0.0
        %385 = vmatprep.subr.mxu0 0.0
        %386 = vmatpush2.xpose.msra.mxu0 0.0
        %387 = vmatprep.subr.mxu0 0.0
        %388 = vmatpush2.xpose.msra.mxu0 0.0
        %389 = vmatprep.mubr.f32.mxu0 0.0
        %390 = vmatmul.mubr.f32.gmra.mxu0 %v320
        %v391 = vpop.f32.mrf.mxu0
        %v392 = vadd.f32 0.0, %v391
        %v393 = vpop.f32.mrf.mxu0
        %394 = vdwg.mxu0
        %vm395 = vcmask 64512
        %v396 = vsel %vm395, %v392, -inf
        %397 = vmax.xlane.f32.xlu0 %v396
        %v398 = vpop.xlane.xlu0 %397
        %v399 = vsub.f32 %v392, %v398
        %v400 = vmul.f32 %v399, 1.442695
        %v401 = vpow.pop %v400
        %v402 = vsel %vm395, %v401, 0.0
        %403 = vadd.xlane.f32.xlu0 %v402
        %v404 = vpop.xlane.xlu0 %403
        %v405 = vrcp.pop %v404
        %v406 = vmul.f32 %v401, %v405
        %407 = vst.msk [vmem:[%s313] sm:$0xff] %vm395, %v406
        %v409 = vsel %vm395, %v406, 0
        %411 = vmatprep.subr.mxu0 0.0
        %412 = vmatpush1.msra.mxu0 0.0
        %413 = vmatprep.subr.mxu0 0.0
        %414 = vmatpush1.msra.mxu0 0.0
        %415 = vmatprep.subr.mxu0 0.0
        %416 = vmatpush1.msra.mxu0 0.0
        %417 = vmatprep.subr.mxu0 0.0
        %418 = vmatpush1.msra.mxu0 0.0
        %419 = vmatprep.subr.mxu0 0.0
        %420 = vmatpush1.msra.mxu0 0.0
        %421 = vmatprep.subr.mxu0 0.0
        %422 = vmatpush1.msra.mxu0 0.0
        %423 = vmatprep.subr.mxu0 0.0
        %424 = vmatpush1.msra.mxu0 0.0
        %425 = vmatprep.subr.mxu0 0.0
        %426 = vmatpush1.msra.mxu0 0.0
        %427 = vmatprep.subr.mxu0 0.0
        %428 = vmatpush1.msra.mxu0 0.0
        %429 = vmatprep.subr.mxu0 0.0
        %430 = vmatpush1.msra.mxu0 0.0
        %431 = vmatprep.subr.mxu0 0.0
        %432 = vmatpush1.msra.mxu0 0.0
        %433 = vmatprep.subr.mxu0 0.0
        %434 = vmatpush1.msra.mxu0 0.0
        %435 = vmatprep.subr.mxu0 0.0
        %436 = vmatpush1.msra.mxu0 0.0
        %437 = vmatprep.subr.mxu0 0.0
        %438 = vmatpush1.msra.mxu0 0.0
        %439 = vmatprep.subr.mxu0 0.0
        %440 = vmatpush1.msra.mxu0 0.0
        %441 = vmatprep.subr.mxu0 0.0
        %442 = vmatpush1.msra.mxu0 %v317
        %443 = vmatprep.subr.mxu0 0.0
        %444 = vmatpush2.msra.mxu0 0.0
        %445 = vmatprep.subr.mxu0 0.0
        %446 = vmatpush2.msra.mxu0 0.0
        %447 = vmatprep.subr.mxu0 0.0
        %448 = vmatpush2.msra.mxu0 0.0
        %449 = vmatprep.subr.mxu0 0.0
        %450 = vmatpush2.msra.mxu0 0.0
        %451 = vmatprep.subr.mxu0 0.0
        %452 = vmatpush2.msra.mxu0 0.0
        %453 = vmatprep.subr.mxu0 0.0
        %454 = vmatpush2.msra.mxu0 0.0
        %455 = vmatprep.subr.mxu0 0.0
        %456 = vmatpush2.msra.mxu0 0.0
        %457 = vmatprep.subr.mxu0 0.0
        %458 = vmatpush2.msra.mxu0 0.0
        %459 = vmatprep.subr.mxu0 0.0
        %460 = vmatpush2.msra.mxu0 0.0
        %461 = vmatprep.subr.mxu0 0.0
        %462 = vmatpush2.msra.mxu0 0.0
        %463 = vmatprep.subr.mxu0 0.0
        %464 = vmatpush2.msra.mxu0 0.0
        %465 = vmatprep.subr.mxu0 0.0
        %466 = vmatpush2.msra.mxu0 0.0
        %467 = vmatprep.subr.mxu0 0.0
        %468 = vmatpush2.msra.mxu0 0.0
        %469 = vmatprep.subr.mxu0 0.0
        %470 = vmatpush2.msra.mxu0 0.0
        %471 = vmatprep.subr.mxu0 0.0
        %472 = vmatpush2.msra.mxu0 0.0
        %473 = vmatprep.subr.mxu0 0.0
        %474 = vmatpush2.msra.mxu0 0.0
        %475 = vmatprep.mubr.f32.mxu0 0.0
        %476 = vmatmul.mubr.f32.gmra.mxu0 %v409
        %v477 = vpop.f32.mrf.mxu0
        %v478 = vadd.f32 0.0, %v477
        %v479 = vpop.f32.mrf.mxu0
        %480 = vdwg.mxu0
        %481 = vst.msk [vmem:[%s306] sm:$0xff] %vm318, %v478
        %482 = vrot.lane.b32.xlu0 %v315, 96
        %v483 = vpop.permute.xlu0 %482
        %484 = vrot.lane.b32.xlu0 %v316, 96
        %v485 = vpop.permute.xlu0 %484
        %v486 = vsel %vm318, %v483, 0
        %v488 = vsel %vm318, %v485, 0
        %490 = vmatprep.subr.mxu0 0.0
        %491 = vmatpush1.xpose.msra.mxu0 0.0
        %492 = vmatprep.subr.mxu0 0.0
        %493 = vmatpush1.xpose.msra.mxu0 0.0
        %494 = vmatprep.subr.mxu0 0.0
        %495 = vmatpush1.xpose.msra.mxu0 0.0
        %496 = vmatprep.subr.mxu0 0.0
        %497 = vmatpush1.xpose.msra.mxu0 0.0
        %498 = vmatprep.subr.mxu0 0.0
        %499 = vmatpush1.xpose.msra.mxu0 0.0
        %500 = vmatprep.subr.mxu0 0.0
        %501 = vmatpush1.xpose.msra.mxu0 0.0
        %502 = vmatprep.subr.mxu0 0.0
        %503 = vmatpush1.xpose.msra.mxu0 0.0
        %504 = vmatprep.subr.mxu0 0.0
        %505 = vmatpush1.xpose.msra.mxu0 0.0
        %506 = vmatprep.subr.mxu0 0.0
        %507 = vmatpush1.xpose.msra.mxu0 0.0
        %508 = vmatprep.subr.mxu0 0.0
        %509 = vmatpush1.xpose.msra.mxu0 0.0
        %510 = vmatprep.subr.mxu0 0.0
        %511 = vmatpush1.xpose.msra.mxu0 0.0
        %512 = vmatprep.subr.mxu0 0.0
        %513 = vmatpush1.xpose.msra.mxu0 0.0
        %514 = vmatprep.subr.mxu0 0.0
        %515 = vmatpush1.xpose.msra.mxu0 0.0
        %516 = vmatprep.subr.mxu0 0.0
        %517 = vmatpush1.xpose.msra.mxu0 0.0
        %518 = vmatprep.subr.mxu0 0.0
        %519 = vmatpush1.xpose.msra.mxu0 0.0
        %520 = vmatprep.subr.mxu0 0.0
        %521 = vmatpush1.xpose.msra.mxu0 %v488
        %522 = vmatprep.subr.mxu0 0.0
        %523 = vmatpush2.xpose.msra.mxu0 0.0
        %524 = vmatprep.subr.mxu0 0.0
        %525 = vmatpush2.xpose.msra.mxu0 0.0
        %526 = vmatprep.subr.mxu0 0.0
        %527 = vmatpush2.xpose.msra.mxu0 0.0
        %528 = vmatprep.subr.mxu0 0.0
        %529 = vmatpush2.xpose.msra.mxu0 0.0
        %530 = vmatprep.subr.mxu0 0.0
        %531 = vmatpush2.xpose.msra.mxu0 0.0
        %532 = vmatprep.subr.mxu0 0.0
        %533 = vmatpush2.xpose.msra.mxu0 0.0
        %534 = vmatprep.subr.mxu0 0.0
        %535 = vmatpush2.xpose.msra.mxu0 0.0
        %536 = vmatprep.subr.mxu0 0.0
        %537 = vmatpush2.xpose.msra.mxu0 0.0
        %538 = vmatprep.subr.mxu0 0.0
        %539 = vmatpush2.xpose.msra.mxu0 0.0
        %540 = vmatprep.subr.mxu0 0.0
        %541 = vmatpush2.xpose.msra.mxu0 0.0
        %542 = vmatprep.subr.mxu0 0.0
        %543 = vmatpush2.xpose.msra.mxu0 0.0
        %544 = vmatprep.subr.mxu0 0.0
        %545 = vmatpush2.xpose.msra.mxu0 0.0
        %546 = vmatprep.subr.mxu0 0.0
        %547 = vmatpush2.xpose.msra.mxu0 0.0
        %548 = vmatprep.subr.mxu0 0.0
        %549 = vmatpush2.xpose.msra.mxu0 0.0
        %550 = vmatprep.subr.mxu0 0.0
        %551 = vmatpush2.xpose.msra.mxu0 0.0
        %552 = vmatprep.subr.mxu0 0.0
        %553 = vmatpush2.xpose.msra.mxu0 0.0
        %554 = vmatprep.mubr.f32.mxu0 0.0
        %555 = vmatmul.mubr.f32.gmra.mxu0 %v486
        %v556 = vpop.f32.mrf.mxu0
        %v557 = vadd.f32 0.0, %v556
        %v558 = vpop.f32.mrf.mxu0
        %559 = vdwg.mxu0
        %v560 = vsel %vm395, %v557, -inf
        %561 = vmax.xlane.f32.xlu0 %v560
        %v562 = vpop.xlane.xlu0 %561
        %v563 = vsub.f32 %v557, %v562
        %v564 = vmul.f32 %v563, 1.442695
        %v565 = vpow.pop %v564
        %v566 = vsel %vm395, %v565, 0.0
        %567 = vadd.xlane.f32.xlu0 %v566
        %v568 = vpop.xlane.xlu0 %567
        %v569 = vrcp.pop %v568
        %v570 = vmul.f32 %v565, %v569
        %s571 = scalar_lea.vmem %s313, 8 [#allocation9]
        %572 = vst.msk [vmem:[%s571] sm:$0xff] %vm395, %v570
        %574 = vrot.lane.b32.xlu0 %v317, 96
        %v575 = vpop.permute.xlu0 %574
        %v578 = vsel %vm395, %v570, 0
        %580 = vmatprep.subr.mxu0 0.0
        %581 = vmatpush1.msra.mxu0 0.0
        %582 = vmatprep.subr.mxu0 0.0
        %583 = vmatpush1.msra.mxu0 0.0
        %584 = vmatprep.subr.mxu0 0.0
        %585 = vmatpush1.msra.mxu0 0.0
        %586 = vmatprep.subr.mxu0 0.0
        %587 = vmatpush1.msra.mxu0 0.0
        %588 = vmatprep.subr.mxu0 0.0
        %589 = vmatpush1.msra.mxu0 0.0
        %590 = vmatprep.subr.mxu0 0.0
        %591 = vmatpush1.msra.mxu0 0.0
        %592 = vmatprep.subr.mxu0 0.0
        %593 = vmatpush1.msra.mxu0 0.0
        %594 = vmatprep.subr.mxu0 0.0
        %595 = vmatpush1.msra.mxu0 0.0
        %596 = vmatprep.subr.mxu0 0.0
        %597 = vmatpush1.msra.mxu0 0.0
        %598 = vmatprep.subr.mxu0 0.0
        %599 = vmatpush1.msra.mxu0 0.0
        %600 = vmatprep.subr.mxu0 0.0
        %601 = vmatpush1.msra.mxu0 0.0
        %602 = vmatprep.subr.mxu0 0.0
        %603 = vmatpush1.msra.mxu0 0.0
        %604 = vmatprep.subr.mxu0 0.0
        %605 = vmatpush1.msra.mxu0 0.0
        %606 = vmatprep.subr.mxu0 0.0
        %607 = vmatpush1.msra.mxu0 0.0
        %608 = vmatprep.subr.mxu0 0.0
        %609 = vmatpush1.msra.mxu0 0.0
        %610 = vmatprep.subr.mxu0 0.0
        %611 = vmatpush1.msra.mxu0 %v575
        %612 = vmatprep.subr.mxu0 0.0
        %613 = vmatpush2.msra.mxu0 0.0
        %614 = vmatprep.subr.mxu0 0.0
        %615 = vmatpush2.msra.mxu0 0.0
        %616 = vmatprep.subr.mxu0 0.0
        %617 = vmatpush2.msra.mxu0 0.0
        %618 = vmatprep.subr.mxu0 0.0
        %619 = vmatpush2.msra.mxu0 0.0
        %620 = vmatprep.subr.mxu0 0.0
        %621 = vmatpush2.msra.mxu0 0.0
        %622 = vmatprep.subr.mxu0 0.0
        %623 = vmatpush2.msra.mxu0 0.0
        %624 = vmatprep.subr.mxu0 0.0
        %625 = vmatpush2.msra.mxu0 0.0
        %626 = vmatprep.subr.mxu0 0.0
        %627 = vmatpush2.msra.mxu0 0.0
        %628 = vmatprep.subr.mxu0 0.0
        %629 = vmatpush2.msra.mxu0 0.0
        %630 = vmatprep.subr.mxu0 0.0
        %631 = vmatpush2.msra.mxu0 0.0
        %632 = vmatprep.subr.mxu0 0.0
        %633 = vmatpush2.msra.mxu0 0.0
        %634 = vmatprep.subr.mxu0 0.0
        %635 = vmatpush2.msra.mxu0 0.0
        %636 = vmatprep.subr.mxu0 0.0
        %637 = vmatpush2.msra.mxu0 0.0
        %638 = vmatprep.subr.mxu0 0.0
        %639 = vmatpush2.msra.mxu0 0.0
        %640 = vmatprep.subr.mxu0 0.0
        %641 = vmatpush2.msra.mxu0 0.0
        %642 = vmatprep.subr.mxu0 0.0
        %643 = vmatpush2.msra.mxu0 0.0
        %644 = vmatprep.mubr.f32.mxu0 0.0
        %645 = vmatmul.mubr.f32.gmra.mxu0 %v578
        %v646 = vpop.f32.mrf.mxu0
        %v647 = vadd.f32 0.0, %v646
        %v648 = vpop.f32.mrf.mxu0
        %649 = vdwg.mxu0
        %651 = vrot.lane.b32.xlu0 %v647, 32
        %v652 = vpop.permute.xlu0 %651
        %vm654 = vcmask 523520
        %655 = vst.msk [vmem:[%s306] sm:$0xff] %vm654, %v652
        %656 = vrot.lane.b32.xlu0 %v315, 64
        %v657 = vpop.permute.xlu0 %656
        %658 = vrot.lane.b32.xlu0 %v316, 64
        %v659 = vpop.permute.xlu0 %658
        %v660 = vsel %vm318, %v657, 0
        %v662 = vsel %vm318, %v659, 0
        %664 = vmatprep.subr.mxu0 0.0
        %665 = vmatpush1.xpose.msra.mxu0 0.0
        %666 = vmatprep.subr.mxu0 0.0
        %667 = vmatpush1.xpose.msra.mxu0 0.0
        %668 = vmatprep.subr.mxu0 0.0
        %669 = vmatpush1.xpose.msra.mxu0 0.0
        %670 = vmatprep.subr.mxu0 0.0
        %671 = vmatpush1.xpose.msra.mxu0 0.0
        %672 = vmatprep.subr.mxu0 0.0
        %673 = vmatpush1.xpose.msra.mxu0 0.0
        %674 = vmatprep.subr.mxu0 0.0
        %675 = vmatpush1.xpose.msra.mxu0 0.0
        %676 = vmatprep.subr.mxu0 0.0
        %677 = vmatpush1.xpose.msra.mxu0 0.0
        %678 = vmatprep.subr.mxu0 0.0
        %679 = vmatpush1.xpose.msra.mxu0 0.0
        %680 = vmatprep.subr.mxu0 0.0
        %681 = vmatpush1.xpose.msra.mxu0 0.0
        %682 = vmatprep.subr.mxu0 0.0
        %683 = vmatpush1.xpose.msra.mxu0 0.0
        %684 = vmatprep.subr.mxu0 0.0
        %685 = vmatpush1.xpose.msra.mxu0 0.0
        %686 = vmatprep.subr.mxu0 0.0
        %687 = vmatpush1.xpose.msra.mxu0 0.0
        %688 = vmatprep.subr.mxu0 0.0
        %689 = vmatpush1.xpose.msra.mxu0 0.0
        %690 = vmatprep.subr.mxu0 0.0
        %691 = vmatpush1.xpose.msra.mxu0 0.0
        %692 = vmatprep.subr.mxu0 0.0
        %693 = vmatpush1.xpose.msra.mxu0 0.0
        %694 = vmatprep.subr.mxu0 0.0
        %695 = vmatpush1.xpose.msra.mxu0 %v662
        %696 = vmatprep.subr.mxu0 0.0
        %697 = vmatpush2.xpose.msra.mxu0 0.0
        %698 = vmatprep.subr.mxu0 0.0
        %699 = vmatpush2.xpose.msra.mxu0 0.0
        %700 = vmatprep.subr.mxu0 0.0
        %701 = vmatpush2.xpose.msra.mxu0 0.0
        %702 = vmatprep.subr.mxu0 0.0
        %703 = vmatpush2.xpose.msra.mxu0 0.0
        %704 = vmatprep.subr.mxu0 0.0
        %705 = vmatpush2.xpose.msra.mxu0 0.0
        %706 = vmatprep.subr.mxu0 0.0
        %707 = vmatpush2.xpose.msra.mxu0 0.0
        %708 = vmatprep.subr.mxu0 0.0
        %709 = vmatpush2.xpose.msra.mxu0 0.0
        %710 = vmatprep.subr.mxu0 0.0
        %711 = vmatpush2.xpose.msra.mxu0 0.0
        %712 = vmatprep.subr.mxu0 0.0
        %713 = vmatpush2.xpose.msra.mxu0 0.0
        %714 = vmatprep.subr.mxu0 0.0
        %715 = vmatpush2.xpose.msra.mxu0 0.0
        %716 = vmatprep.subr.mxu0 0.0
        %717 = vmatpush2.xpose.msra.mxu0 0.0
        %718 = vmatprep.subr.mxu0 0.0
        %719 = vmatpush2.xpose.msra.mxu0 0.0
        %720 = vmatprep.subr.mxu0 0.0
        %721 = vmatpush2.xpose.msra.mxu0 0.0
        %722 = vmatprep.subr.mxu0 0.0
        %723 = vmatpush2.xpose.msra.mxu0 0.0
        %724 = vmatprep.subr.mxu0 0.0
        %725 = vmatpush2.xpose.msra.mxu0 0.0
        %726 = vmatprep.subr.mxu0 0.0
        %727 = vmatpush2.xpose.msra.mxu0 0.0
        %728 = vmatprep.mubr.f32.mxu0 0.0
        %729 = vmatmul.mubr.f32.gmra.mxu0 %v660
        %v730 = vpop.f32.mrf.mxu0
        %v731 = vadd.f32 0.0, %v730
        %v732 = vpop.f32.mrf.mxu0
        %733 = vdwg.mxu0
        %v734 = vsel %vm395, %v731, -inf
        %735 = vmax.xlane.f32.xlu0 %v734
        %v736 = vpop.xlane.xlu0 %735
        %v737 = vsub.f32 %v731, %v736
        %v738 = vmul.f32 %v737, 1.442695
        %v739 = vpow.pop %v738
        %v740 = vsel %vm395, %v739, 0.0
        %741 = vadd.xlane.f32.xlu0 %v740
        %v742 = vpop.xlane.xlu0 %741
        %v743 = vrcp.pop %v742
        %v744 = vmul.f32 %v739, %v743
        %s745 = scalar_lea.vmem %s313, 16 [#allocation9]
        %746 = vst.msk [vmem:[%s745] sm:$0xff] %vm395, %v744
        %747 = vrot.lane.b32.xlu0 %v317, 64
        %v748 = vpop.permute.xlu0 %747
        %v751 = vsel %vm395, %v744, 0
        %753 = vmatprep.subr.mxu0 0.0
        %754 = vmatpush1.msra.mxu0 0.0
        %755 = vmatprep.subr.mxu0 0.0
        %756 = vmatpush1.msra.mxu0 0.0
        %757 = vmatprep.subr.mxu0 0.0
        %758 = vmatpush1.msra.mxu0 0.0
        %759 = vmatprep.subr.mxu0 0.0
        %760 = vmatpush1.msra.mxu0 0.0
        %761 = vmatprep.subr.mxu0 0.0
        %762 = vmatpush1.msra.mxu0 0.0
        %763 = vmatprep.subr.mxu0 0.0
        %764 = vmatpush1.msra.mxu0 0.0
        %765 = vmatprep.subr.mxu0 0.0
        %766 = vmatpush1.msra.mxu0 0.0
        %767 = vmatprep.subr.mxu0 0.0
        %768 = vmatpush1.msra.mxu0 0.0
        %769 = vmatprep.subr.mxu0 0.0
        %770 = vmatpush1.msra.mxu0 0.0
        %771 = vmatprep.subr.mxu0 0.0
        %772 = vmatpush1.msra.mxu0 0.0
        %773 = vmatprep.subr.mxu0 0.0
        %774 = vmatpush1.msra.mxu0 0.0
        %775 = vmatprep.subr.mxu0 0.0
        %776 = vmatpush1.msra.mxu0 0.0
        %777 = vmatprep.subr.mxu0 0.0
        %778 = vmatpush1.msra.mxu0 0.0
        %779 = vmatprep.subr.mxu0 0.0
        %780 = vmatpush1.msra.mxu0 0.0
        %781 = vmatprep.subr.mxu0 0.0
        %782 = vmatpush1.msra.mxu0 0.0
        %783 = vmatprep.subr.mxu0 0.0
        %784 = vmatpush1.msra.mxu0 %v748
        %785 = vmatprep.subr.mxu0 0.0
        %786 = vmatpush2.msra.mxu0 0.0
        %787 = vmatprep.subr.mxu0 0.0
        %788 = vmatpush2.msra.mxu0 0.0
        %789 = vmatprep.subr.mxu0 0.0
        %790 = vmatpush2.msra.mxu0 0.0
        %791 = vmatprep.subr.mxu0 0.0
        %792 = vmatpush2.msra.mxu0 0.0
        %793 = vmatprep.subr.mxu0 0.0
        %794 = vmatpush2.msra.mxu0 0.0
        %795 = vmatprep.subr.mxu0 0.0
        %796 = vmatpush2.msra.mxu0 0.0
        %797 = vmatprep.subr.mxu0 0.0
        %798 = vmatpush2.msra.mxu0 0.0
        %799 = vmatprep.subr.mxu0 0.0
        %800 = vmatpush2.msra.mxu0 0.0
        %801 = vmatprep.subr.mxu0 0.0
        %802 = vmatpush2.msra.mxu0 0.0
        %803 = vmatprep.subr.mxu0 0.0
        %804 = vmatpush2.msra.mxu0 0.0
        %805 = vmatprep.subr.mxu0 0.0
        %806 = vmatpush2.msra.mxu0 0.0
        %807 = vmatprep.subr.mxu0 0.0
        %808 = vmatpush2.msra.mxu0 0.0
        %809 = vmatprep.subr.mxu0 0.0
        %810 = vmatpush2.msra.mxu0 0.0
        %811 = vmatprep.subr.mxu0 0.0
        %812 = vmatpush2.msra.mxu0 0.0
        %813 = vmatprep.subr.mxu0 0.0
        %814 = vmatpush2.msra.mxu0 0.0
        %815 = vmatprep.subr.mxu0 0.0
        %816 = vmatpush2.msra.mxu0 0.0
        %817 = vmatprep.mubr.f32.mxu0 0.0
        %818 = vmatmul.mubr.f32.gmra.mxu0 %v751
        %v819 = vpop.f32.mrf.mxu0
        %v820 = vadd.f32 0.0, %v819
        %v821 = vpop.f32.mrf.mxu0
        %822 = vdwg.mxu0
        %824 = vrot.lane.b32.xlu0 %v820, 64
        %v825 = vpop.permute.xlu0 %824
        %vm827 = vcmask 785920
        %828 = vst.msk [vmem:[%s306] sm:$0xff] %vm827, %v825
        %829 = vrot.lane.b32.xlu0 %v315, 32
        %v830 = vpop.permute.xlu0 %829
        %831 = vrot.lane.b32.xlu0 %v316, 32
        %v832 = vpop.permute.xlu0 %831
        %v833 = vsel %vm318, %v830, 0
        %v835 = vsel %vm318, %v832, 0
        %837 = vmatprep.subr.mxu0 0.0
        %838 = vmatpush1.xpose.msra.mxu0 0.0
        %839 = vmatprep.subr.mxu0 0.0
        %840 = vmatpush1.xpose.msra.mxu0 0.0
        %841 = vmatprep.subr.mxu0 0.0
        %842 = vmatpush1.xpose.msra.mxu0 0.0
        %843 = vmatprep.subr.mxu0 0.0
        %844 = vmatpush1.xpose.msra.mxu0 0.0
        %845 = vmatprep.subr.mxu0 0.0
        %846 = vmatpush1.xpose.msra.mxu0 0.0
        %847 = vmatprep.subr.mxu0 0.0
        %848 = vmatpush1.xpose.msra.mxu0 0.0
        %849 = vmatprep.subr.mxu0 0.0
        %850 = vmatpush1.xpose.msra.mxu0 0.0
        %851 = vmatprep.subr.mxu0 0.0
        %852 = vmatpush1.xpose.msra.mxu0 0.0
        %853 = vmatprep.subr.mxu0 0.0
        %854 = vmatpush1.xpose.msra.mxu0 0.0
        %855 = vmatprep.subr.mxu0 0.0
        %856 = vmatpush1.xpose.msra.mxu0 0.0
        %857 = vmatprep.subr.mxu0 0.0
        %858 = vmatpush1.xpose.msra.mxu0 0.0
        %859 = vmatprep.subr.mxu0 0.0
        %860 = vmatpush1.xpose.msra.mxu0 0.0
        %861 = vmatprep.subr.mxu0 0.0
        %862 = vmatpush1.xpose.msra.mxu0 0.0
        %863 = vmatprep.subr.mxu0 0.0
        %864 = vmatpush1.xpose.msra.mxu0 0.0
        %865 = vmatprep.subr.mxu0 0.0
        %866 = vmatpush1.xpose.msra.mxu0 0.0
        %867 = vmatprep.subr.mxu0 0.0
        %868 = vmatpush1.xpose.msra.mxu0 %v835
        %869 = vmatprep.subr.mxu0 0.0
        %870 = vmatpush2.xpose.msra.mxu0 0.0
        %871 = vmatprep.subr.mxu0 0.0
        %872 = vmatpush2.xpose.msra.mxu0 0.0
        %873 = vmatprep.subr.mxu0 0.0
        %874 = vmatpush2.xpose.msra.mxu0 0.0
        %875 = vmatprep.subr.mxu0 0.0
        %876 = vmatpush2.xpose.msra.mxu0 0.0
        %877 = vmatprep.subr.mxu0 0.0
        %878 = vmatpush2.xpose.msra.mxu0 0.0
        %879 = vmatprep.subr.mxu0 0.0
        %880 = vmatpush2.xpose.msra.mxu0 0.0
        %881 = vmatprep.subr.mxu0 0.0
        %882 = vmatpush2.xpose.msra.mxu0 0.0
        %883 = vmatprep.subr.mxu0 0.0
        %884 = vmatpush2.xpose.msra.mxu0 0.0
        %885 = vmatprep.subr.mxu0 0.0
        %886 = vmatpush2.xpose.msra.mxu0 0.0
        %887 = vmatprep.subr.mxu0 0.0
        %888 = vmatpush2.xpose.msra.mxu0 0.0
        %889 = vmatprep.subr.mxu0 0.0
        %890 = vmatpush2.xpose.msra.mxu0 0.0
        %891 = vmatprep.subr.mxu0 0.0
        %892 = vmatpush2.xpose.msra.mxu0 0.0
        %893 = vmatprep.subr.mxu0 0.0
        %894 = vmatpush2.xpose.msra.mxu0 0.0
        %895 = vmatprep.subr.mxu0 0.0
        %896 = vmatpush2.xpose.msra.mxu0 0.0
        %897 = vmatprep.subr.mxu0 0.0
        %898 = vmatpush2.xpose.msra.mxu0 0.0
        %899 = vmatprep.subr.mxu0 0.0
        %900 = vmatpush2.xpose.msra.mxu0 0.0
        %901 = vmatprep.mubr.f32.mxu0 0.0
        %902 = vmatmul.mubr.f32.gmra.mxu0 %v833
        %v903 = vpop.f32.mrf.mxu0
        %v904 = vadd.f32 0.0, %v903
        %v905 = vpop.f32.mrf.mxu0
        %906 = vdwg.mxu0
        %v907 = vsel %vm395, %v904, -inf
        %908 = vmax.xlane.f32.xlu0 %v907
        %v909 = vpop.xlane.xlu0 %908
        %v910 = vsub.f32 %v904, %v909
        %v911 = vmul.f32 %v910, 1.442695
        %v912 = vpow.pop %v911
        %v913 = vsel %vm395, %v912, 0.0
        %914 = vadd.xlane.f32.xlu0 %v913
        %v915 = vpop.xlane.xlu0 %914
        %v916 = vrcp.pop %v915
        %v917 = vmul.f32 %v912, %v916
        %s918 = scalar_lea.vmem %s313, 24 [#allocation9]
        %919 = vst.msk [vmem:[%s918] sm:$0xff] %vm395, %v917
        %920 = vrot.lane.b32.xlu0 %v317, 32
        %v921 = vpop.permute.xlu0 %920
        %v924 = vsel %vm395, %v917, 0
        %926 = vmatprep.subr.mxu0 0.0
        %927 = vmatpush1.msra.mxu0 0.0
        %928 = vmatprep.subr.mxu0 0.0
        %929 = vmatpush1.msra.mxu0 0.0
        %930 = vmatprep.subr.mxu0 0.0
        %931 = vmatpush1.msra.mxu0 0.0
        %932 = vmatprep.subr.mxu0 0.0
        %933 = vmatpush1.msra.mxu0 0.0
        %934 = vmatprep.subr.mxu0 0.0
        %935 = vmatpush1.msra.mxu0 0.0
        %936 = vmatprep.subr.mxu0 0.0
        %937 = vmatpush1.msra.mxu0 0.0
        %938 = vmatprep.subr.mxu0 0.0
        %939 = vmatpush1.msra.mxu0 0.0
        %940 = vmatprep.subr.mxu0 0.0
        %941 = vmatpush1.msra.mxu0 0.0
        %942 = vmatprep.subr.mxu0 0.0
        %943 = vmatpush1.msra.mxu0 0.0
        %944 = vmatprep.subr.mxu0 0.0
        %945 = vmatpush1.msra.mxu0 0.0
        %946 = vmatprep.subr.mxu0 0.0
        %947 = vmatpush1.msra.mxu0 0.0
        %948 = vmatprep.subr.mxu0 0.0
        %949 = vmatpush1.msra.mxu0 0.0
        %950 = vmatprep.subr.mxu0 0.0
        %951 = vmatpush1.msra.mxu0 0.0
        %952 = vmatprep.subr.mxu0 0.0
        %953 = vmatpush1.msra.mxu0 0.0
        %954 = vmatprep.subr.mxu0 0.0
        %955 = vmatpush1.msra.mxu0 0.0
        %956 = vmatprep.subr.mxu0 0.0
        %957 = vmatpush1.msra.mxu0 %v921
        %958 = vmatprep.subr.mxu0 0.0
        %959 = vmatpush2.msra.mxu0 0.0
        %960 = vmatprep.subr.mxu0 0.0
        %961 = vmatpush2.msra.mxu0 0.0
        %962 = vmatprep.subr.mxu0 0.0
        %963 = vmatpush2.msra.mxu0 0.0
        %964 = vmatprep.subr.mxu0 0.0
        %965 = vmatpush2.msra.mxu0 0.0
        %966 = vmatprep.subr.mxu0 0.0
        %967 = vmatpush2.msra.mxu0 0.0
        %968 = vmatprep.subr.mxu0 0.0
        %969 = vmatpush2.msra.mxu0 0.0
        %970 = vmatprep.subr.mxu0 0.0
        %971 = vmatpush2.msra.mxu0 0.0
        %972 = vmatprep.subr.mxu0 0.0
        %973 = vmatpush2.msra.mxu0 0.0
        %974 = vmatprep.subr.mxu0 0.0
        %975 = vmatpush2.msra.mxu0 0.0
        %976 = vmatprep.subr.mxu0 0.0
        %977 = vmatpush2.msra.mxu0 0.0
        %978 = vmatprep.subr.mxu0 0.0
        %979 = vmatpush2.msra.mxu0 0.0
        %980 = vmatprep.subr.mxu0 0.0
        %981 = vmatpush2.msra.mxu0 0.0
        %982 = vmatprep.subr.mxu0 0.0
        %983 = vmatpush2.msra.mxu0 0.0
        %984 = vmatprep.subr.mxu0 0.0
        %985 = vmatpush2.msra.mxu0 0.0
        %986 = vmatprep.subr.mxu0 0.0
        %987 = vmatpush2.msra.mxu0 0.0
        %988 = vmatprep.subr.mxu0 0.0
        %989 = vmatpush2.msra.mxu0 0.0
        %990 = vmatprep.mubr.f32.mxu0 0.0
        %991 = vmatmul.mubr.f32.gmra.mxu0 %v924
        %v992 = vpop.f32.mrf.mxu0
        %v993 = vadd.f32 0.0, %v992
        %v994 = vpop.f32.mrf.mxu0
        %995 = vdwg.mxu0
        %997 = vrot.lane.b32.xlu0 %v993, 96
        %v998 = vpop.permute.xlu0 %997
        %vm1000 = vcmask 1048320
        %1001 = vst.msk [vmem:[%s306] sm:$0xff] %vm1000, %v998
        %s1002 = sand.u32 %s130, 1
        %s1003 = scalar_lea.sflag [#allocation4], %s1002
        %s1004 = sand.u32 %s130, 1
        %s1005 = smul.addr %s1004, 8
        %s1006 = scalar_lea.vmem [#allocation8], %s1005
        %s1007 = sand.u32 %s158, 1
        %s1008 = scalar_lea.sflag [#allocation10], %s1007
        %s1009 = sand.u32 %s158, 1
        %s1010 = smul.addr %s1009, 32
        %s1011 = scalar_lea.vmem [#allocation9], %s1010
        // Predicated region
        $region45: #{tpu_custom_call.1} parent=31 // pred_check
          %p1012 = pneg %p140
        $region46: #{tpu_custom_call.1} parent=31 // pred_check_branch
          %1014 = sbr.rel (%p1012) target = $region48
        $region47: #{tpu_custom_call.1} parent=31 // pred_region
          %s1016 = ssub.s32 128, 128
          %1017 = vsyncadd %s1003, %s1016
          %s1018 = sadd.s32 %s33, %s32
          %s1019 = smul.addr %s1018, 128
          %s1020 = scalar_lea.hbm %s3, %s1019
          %s1022 = sshll.u32 %s1006, 4
          %s1023 = int_to_ptr.vmem [resolvable:$true] %s1022
          %1025 = dma.vmem_to_hbm [thread:$0]  %s1023, 128, %s1020, %s1003
        $region48: #{tpu_custom_call.1} parent=31 // pred_fallthru
          _
        // Predicated region
        $region49: #{tpu_custom_call.1} parent=31 // pred_check
          %p1026 = pneg %p168
        $region50: #{tpu_custom_call.1} parent=31 // pred_check_branch
          %1028 = sbr.rel (%p1026) target = $region52
        $region51: #{tpu_custom_call.1} parent=31 // pred_region
          %s1030 = ssub.s32 512, 512
          %1031 = vsyncadd %s1008, %s1030
          %s1032 = smul.addr %s32, 4
          %s1033 = sadd.s32 %s33, %s1032
          %s1034 = smul.addr %s1033, 128
          %s1035 = scalar_lea.hbm %s4, %s1034
          %s1036 = sshll.u32 %s1011, 4
          %s1037 = int_to_ptr.vmem [resolvable:$true] %s1036
          %1042 = dma.vmem_to_hbm [thread:$0]  %s1037, 512, %s1035, %s1008, 128, 128, 8
        $region52: #{tpu_custom_call.1} parent=31 // pred_fallthru
          _
      $region32: #{tpu_custom_call.1} parent=5 // pred_fallthru
        _
      %p1043 = scmp.le.s32.totalorder 2, %s23
      // Predicated region
      $region53: #{tpu_custom_call.1} parent=5 // pred_check
        %p1044 = pneg %p1043
      $region54: #{tpu_custom_call.1} parent=5 // pred_check_branch
        %1046 = sbr.rel (%p1044) target = $region56
      $region55: #{tpu_custom_call.1} parent=5 // pred_region
        %s1047 = ssub.s32 %s23, 2
        // Predicated region
        $region57: #{tpu_custom_call.1} parent=55 // pred_check
          %p1048 = pneg %p146
        $region58: #{tpu_custom_call.1} parent=55 // pred_check_branch
          %1050 = sbr.rel (%p1048) target = $region60
        $region59: #{tpu_custom_call.1} parent=55 // pred_region
          %s1051 = sand.u32 %s131, 1
          %s1052 = scalar_lea.sflag [#allocation4], %s1051
          %s1053 = sand.u32 %s131, 1
          %s1054 = smul.addr %s1053, 8
          %s1055 = scalar_lea.vmem [#allocation8], %s1054
          %1056 = dma.done %s1052, 128
        $region60: #{tpu_custom_call.1} parent=55 // pred_fallthru
          _
        // Predicated region
        $region61: #{tpu_custom_call.1} parent=55 // pred_check
          %p1057 = pneg %p174
        $region62: #{tpu_custom_call.1} parent=55 // pred_check_branch
          %1059 = sbr.rel (%p1057) target = $region64
        $region63: #{tpu_custom_call.1} parent=55 // pred_region
          %s1060 = sand.u32 %s159, 1
          %s1061 = scalar_lea.sflag [#allocation10], %s1060
          %s1062 = sand.u32 %s159, 1
          %s1063 = smul.addr %s1062, 32
          %s1064 = scalar_lea.vmem [#allocation9], %s1063
          %1065 = dma.done %s1061, 512
        $region64: #{tpu_custom_call.1} parent=55 // pred_fallthru
          _
      $region56: #{tpu_custom_call.1} parent=5 // pred_fallthru
        _
    $region6: #{tpu_custom_call.1} parent=1 // loop_footer
      %s27 = sadd.s32 1, %s23
    $region7: #{tpu_custom_call.1} parent=1 // loop_footer_branch
      %22 = sbr.rel target = $region3
    $region8: #{tpu_custom_call.1} parent=1 // loop_exit
      _
    %1066 = vsyncpa [#allocation3], 1
    %s1067 = scalar_lea.sflag [#allocation3], 1
    %1068 = vsyncpa %s1067, 1
    %1069 = vsyncpa [#allocation6], 1
    %s1070 = scalar_lea.sflag [#allocation6], 1
    %1071 = vsyncpa %s1070, 1
    %1072 = vsyncpa [#allocation4], 1
    %s1073 = scalar_lea.sflag [#allocation4], 1
    %1074 = vsyncpa %s1073, 1
    %1075 = vsyncpa [#allocation10], 1
    %s1076 = scalar_lea.sflag [#allocation10], 1
    %1077 = vsyncpa %s1076, 1

</llo_original>
